<compile_context>
chip_gen: v5e
topology: v5e:2x2
jax: 0.10.0
libtpu: 0.0.40
codegen_flags: <defaults>
</compile_context>

<pallas_src>
import jax
import jax.numpy as jnp
from jax.experimental import pallas as pl
from jax.experimental.pallas import tpu as pltpu


def _round_up(x, m):
    return ((x + m - 1) // m) * m


def _pick_hidden_tile(H, th):
    """Largest multiple of 128 that divides H and is <= th; fallback: H."""
    if H % 128 != 0:
        return H
    cand = min(_round_up(th, 128), H)
    cand = (cand // 128) * 128
    while cand >= 128:
        if H % cand == 0:
            return cand
        cand -= 128
    return H


def _ffn_kernel(x_ref, w1_ref, b1_ref, w2_ref, b2_ref, o_ref, acc_ref):
    # x_ref:  (tm, E)   row tile of flattened tokens (resident across j)
    # w1_ref: (E, th)   slice of first linear weight
    # b1_ref: (1, th)   slice of first bias (f32)
    # w2_ref: (th, E)   slice of second linear weight
    # b2_ref: (1, E)    second bias (f32)
    # o_ref:  (tm, E)   output tile (same block across j -> resident)
    # acc_ref:(tm, E)   f32 VMEM accumulator
    j = pl.program_id(1)

    @pl.when(j == 0)
    def _():
        acc_ref[...] = jnp.zeros_like(acc_ref)

    # (tm, th) slice of the hidden activation; f32 MXU accumulation.
    h = jnp.dot(x_ref[...], w1_ref[...], preferred_element_type=jnp.float32)
    h = jnp.maximum(h + b1_ref[...], 0.0)          # bias + ReLU in f32 on the VPU

    # Contribution of this hidden slice to the output tile.
    acc_ref[...] += jnp.dot(h.astype(w2_ref.dtype), w2_ref[...],
                            preferred_element_type=jnp.float32)

    @pl.when(j == pl.num_programs(1) - 1)
    def _():
        # Dropout: identity in eval mode.
        o_ref[...] = (acc_ref[...] + b2_ref[...]).astype(o_ref.dtype)


def feed_forward(x, w1, b1, w2, b2, *, tm=256, th=512, compute_dtype=None):
    """x: (B, T, E).  Returns (B, T, E) in x.dtype.

    compute_dtype: optional dtype for the MXU operands (e.g. jnp.bfloat16 on
    v6e/v7x); accumulation and the bias/ReLU epilogue stay float32.
    """
    B, T, E = x.shape
    H = w1.shape[1]                       # 4 * E
    assert w1.shape == (E, H) and w2.shape == (H, E)
    assert b1.shape == (H,) and b2.shape == (E,)
    assert tm % 8 == 0

    out_dtype = x.dtype
    cdtype = jnp.dtype(compute_dtype) if compute_dtype is not None else jnp.dtype(x.dtype)

    # --- row tiling (with remainder padding) ---
    M = B * T
    m_pad8 = _round_up(M, 8)
    tm_eff = min(tm, m_pad8)              # both multiples of 8
    M_pad = _round_up(M, tm_eff)

    # --- hidden tiling ---
    th_eff = _pick_hidden_tile(H, th)

    x2d = x.reshape(M, E)
    if M_pad != M:
        x2d = jnp.pad(x2d, ((0, M_pad - M), (0, 0)))

    x2d = x2d.astype(cdtype)
    w1c = w1.astype(cdtype)
    w2c = w2.astype(cdtype)
    b1_2d = b1.reshape(1, H).astype(jnp.float32)
    b2_2d = b2.reshape(1, E).astype(jnp.float32)

    grid = (M_pad // tm_eff, H // th_eff)

    # --- VMEM budget (double-buffered tiles + scratch), capped for v7x ---
    dsz = cdtype.itemsize
    osz = jnp.dtype(out_dtype).itemsize
    vmem_need = (
        2 * tm_eff * E * dsz          # x tile
        + 2 * E * th_eff * dsz        # w1 tile
        + 2 * th_eff * 4              # b1 tile
        + 2 * th_eff * E * dsz        # w2 tile
        + 2 * E * 4                   # b2
        + 2 * tm_eff * E * osz        # out tile
        + tm_eff * E * 4              # accumulator scratch
        + tm_eff * th_eff * 4         # h intermediate
    )
    vmem_limit = int(min(max(2 * vmem_need, 32 * 1024 * 1024), 56 * 1024 * 1024))

    cost = pl.CostEstimate(
        flops=int(4 * M_pad * E * H),     # two matmuls: 2*M*E*H each
        transcendentals=0,
        bytes_accessed=int(M_pad * E * dsz                      # x
                           + grid[0] * 2 * E * H * dsz          # streamed weights
                           + H * 4 + E * 4                      # biases
                           + M_pad * E * osz),                  # out
    )

    out2d = pl.pallas_call(
        _ffn_kernel,
        out_shape=jax.ShapeDtypeStruct((M_pad, E), out_dtype),
        grid_spec=pltpu.PrefetchScalarGridSpec(
            num_scalar_prefetch=0,
            grid=grid,
            in_specs=[
                pl.BlockSpec((tm_eff, E), lambda i, j: (i, 0)),   # x (resident over j)
                pl.BlockSpec((E, th_eff), lambda i, j: (0, j)),   # w1 slice
                pl.BlockSpec((1, th_eff), lambda i, j: (0, j)),   # b1 slice
                pl.BlockSpec((th_eff, E), lambda i, j: (j, 0)),   # w2 slice
                pl.BlockSpec((1, E), lambda i, j: (0, 0)),        # b2
            ],
            out_specs=pl.BlockSpec((tm_eff, E), lambda i, j: (i, 0)),
            scratch_shapes=[pltpu.VMEM((tm_eff, E), jnp.float32)],
        ),
        compiler_params=pltpu.CompilerParams(
            dimension_semantics=("parallel", "arbitrary"),
            vmem_limit_bytes=vmem_limit,
        ),
        cost_estimate=cost,
    )(x2d, w1c, b1_2d, w2c, b2_2d)

    return out2d[:M].reshape(B, T, E)


def init_params(key, embedding_size):
    """Deterministic init matching nn.Linear's U(-1/sqrt(in), 1/sqrt(in))."""
    E = embedding_size
    H = 4 * E
    k1, k2, k3, k4 = jax.random.split(key, 4)
    lim1 = 1.0 / jnp.sqrt(E)
    lim2 = 1.0 / jnp.sqrt(H)
    # stored as (in_features, out_features) == PyTorch weight transposed
    w1 = jax.random.uniform(k1, (E, H), jnp.float32, -lim1, lim1)
    b1 = jax.random.uniform(k2, (H,), jnp.float32, -lim1, lim1)
    w2 = jax.random.uniform(k3, (H, E), jnp.float32, -lim2, lim2)
    b2 = jax.random.uniform(k4, (E,), jnp.float32, -lim2, lim2)
    return w1, b1, w2, b2


if __name__ == "__main__":
    # Small but lane-dense shapes: E = 128 -> hidden = 512 (last dims multiples of 128).
    B, T, E = 2, 8, 128
    key = jax.random.PRNGKey(0)
    kx, kp = jax.random.split(key)

    x = jax.random.normal(kx, (B, T, E), jnp.float32)
    w1, b1, w2, b2 = init_params(kp, E)

    # Pure-JAX reference (dropout = identity in eval mode).
    ref = (jnp.maximum(x.reshape(-1, E) @ w1 + b1, 0.0) @ w2 + b2).reshape(B, T, E)

    # f32 operand path: tight check.
    out = feed_forward(x, w1, b1, w2, b2)
    out = jax.block_until_ready(out)
    assert out.shape == (B, T, E)
    assert jnp.allclose(out, ref, atol=1e-4, rtol=1e-4)

    # Force multi-step reduction (th smaller than H) to exercise the accumulator path.
    out_tiled = feed_forward(x, w1, b1, w2, b2, tm=16, th=128)
    out_tiled = jax.block_until_ready(out_tiled)
    assert jnp.allclose(out_tiled, ref, atol=1e-4, rtol=1e-4)

    # bf16 MXU-operand path (v6e/v7x fast path), f32 accumulation: looser check.
    out_bf16 = feed_forward(x, w1, b1, w2, b2, compute_dtype=jnp.bfloat16)
    out_bf16 = jax.block_until_ready(out_bf16)
    assert out_bf16.shape == (B, T, E)
    assert jnp.allclose(out_bf16, ref, atol=5e-2, rtol=5e-2)

    print("KERNEL_OK")
</pallas_src>

<mosaic_0001>
module attributes {stable_mosaic.version = 11 : i64} {
  func.func @_ffn_kernel(%arg0: i32, %arg1: i32, %arg2: memref<16x128xf32, #tpu.memory_space<vmem>>, %arg3: memref<128x512xf32, #tpu.memory_space<vmem>>, %arg4: memref<1x512xf32, #tpu.memory_space<vmem>>, %arg5: memref<512x128xf32, #tpu.memory_space<vmem>>, %arg6: memref<1x128xf32, #tpu.memory_space<vmem>>, %arg7: memref<16x128xf32, #tpu.memory_space<vmem>>, %arg8: memref<16x128xf32, #tpu.memory_space<vmem>>) attributes {dimension_semantics = [#tpu.dimension_semantics<parallel>, #tpu.dimension_semantics<arbitrary>], iteration_bounds = array<i64: 1, 1>, scalar_prefetch = 0 : i64, scratch_operands = 1 : i64, tpu.core_type = #tpu.core_type<tc>, window_params = [{transform_indices = @transform_0, window_bounds = array<i64: 16, 128>}, {transform_indices = @transform_1, window_bounds = array<i64: 128, 512>}, {transform_indices = @transform_2, window_bounds = array<i64: 1, 512>}, {transform_indices = @transform_3, window_bounds = array<i64: 512, 128>}, {pipeline_mode = #tpu.pipeline_mode<synchronous>, transform_indices = @transform_4, window_bounds = array<i64: 1, 128>}, {transform_indices = @transform_5, window_bounds = array<i64: 16, 128>}]} {
    %c0_i32 = arith.constant 0 : i32
    %0 = arith.cmpi eq, %arg1, %c0_i32 : i32
    %1 = arith.extui %0 : i1 to i32
    %c0_i32_0 = arith.constant 0 : i32
    %2 = arith.cmpi ne, %1, %c0_i32_0 : i32
    scf.if %2 {
      %cst_16 = arith.constant 0.000000e+00 : f32
      %19 = vector.broadcast %cst_16 : f32 to vector<16x128xf32>
      %c0_17 = arith.constant 0 : index
      %c0_18 = arith.constant 0 : index
      %20 = vector.load %arg8[%c0_17, %c0_18] : memref<16x128xf32, #tpu.memory_space<vmem>>, vector<16x128xf32>
      tpu.vector_store %arg8[%c0_17, %c0_18], %19 {strides = array<i32>} : memref<16x128xf32, #tpu.memory_space<vmem>>, vector<16x128xf32>,
    } else {
    }
    %c0 = arith.constant 0 : index
    %c0_1 = arith.constant 0 : index
    %3 = vector.load %arg2[%c0, %c0_1] : memref<16x128xf32, #tpu.memory_space<vmem>>, vector<16x128xf32>
    %c0_2 = arith.constant 0 : index
    %c0_3 = arith.constant 0 : index
    %4 = vector.load %arg3[%c0_2, %c0_3] : memref<128x512xf32, #tpu.memory_space<vmem>>, vector<128x512xf32>
    %cst = arith.constant dense<0.000000e+00> : vector<16x512xf32>
    %5 = tpu.matmul %3, %4, %cst {dimension_numbers = #tpu.dot_dimension_numbers<[1], [0], [0], [1], [0, 0, 1, 1], [], []>} : vector<16x128xf32>, vector<128x512xf32>, vector<16x512xf32> -> vector<16x512xf32>
    %c0_4 = arith.constant 0 : index
    %c0_5 = arith.constant 0 : index
    %6 = vector.load %arg4[%c0_4, %c0_5] : memref<1x512xf32, #tpu.memory_space<vmem>>, vector<1x512xf32>
    %7 = vector.broadcast %6 : vector<1x512xf32> to vector<16x512xf32>
    %8 = arith.addf %5, %7 : vector<16x512xf32>
    %cst_6 = arith.constant 0.000000e+00 : f32
    %9 = vector.broadcast %cst_6 : f32 to vector<16x512xf32>
    %10 = arith.maximumf %8, %9 : vector<16x512xf32>
    %c0_7 = arith.constant 0 : index
    %c0_8 = arith.constant 0 : index
    %11 = vector.load %arg8[%c0_7, %c0_8] : memref<16x128xf32, #tpu.memory_space<vmem>>, vector<16x128xf32>
    %c0_9 = arith.constant 0 : index
    %c0_10 = arith.constant 0 : index
    %12 = vector.load %arg5[%c0_9, %c0_10] : memref<512x128xf32, #tpu.memory_space<vmem>>, vector<512x128xf32>
    %cst_11 = arith.constant dense<0.000000e+00> : vector<16x128xf32>
    %13 = tpu.matmul %10, %12, %cst_11 {dimension_numbers = #tpu.dot_dimension_numbers<[1], [0], [0], [1], [0, 0, 1, 1], [], []>} : vector<16x512xf32>, vector<512x128xf32>, vector<16x128xf32> -> vector<16x128xf32>
    %14 = arith.addf %11, %13 : vector<16x128xf32>
    %c0_12 = arith.constant 0 : index
    %c0_13 = arith.constant 0 : index
    %15 = vector.load %arg8[%c0_12, %c0_13] : memref<16x128xf32, #tpu.memory_space<vmem>>, vector<16x128xf32>
    tpu.vector_store %arg8[%c0_12, %c0_13], %14 {strides = array<i32>} : memref<16x128xf32, #tpu.memory_space<vmem>>, vector<16x128xf32>,
    %c0_i32_14 = arith.constant 0 : i32
    %16 = arith.cmpi eq, %arg1, %c0_i32_14 : i32
    %17 = arith.extui %16 : i1 to i32
    %c0_i32_15 = arith.constant 0 : i32
    %18 = arith.cmpi ne, %17, %c0_i32_15 : i32
    scf.if %18 {
      %c0_16 = arith.constant 0 : index
      %c0_17 = arith.constant 0 : index
      %19 = vector.load %arg8[%c0_16, %c0_17] : memref<16x128xf32, #tpu.memory_space<vmem>>, vector<16x128xf32>
      %c0_18 = arith.constant 0 : index
      %c0_19 = arith.constant 0 : index
      %20 = vector.load %arg6[%c0_18, %c0_19] : memref<1x128xf32, #tpu.memory_space<vmem>>, vector<1x128xf32>
      %21 = vector.broadcast %20 : vector<1x128xf32> to vector<16x128xf32>
      %22 = arith.addf %19, %21 : vector<16x128xf32>
      %c0_20 = arith.constant 0 : index
      %c0_21 = arith.constant 0 : index
      %23 = vector.load %arg7[%c0_20, %c0_21] : memref<16x128xf32, #tpu.memory_space<vmem>>, vector<16x128xf32>
      tpu.vector_store %arg7[%c0_20, %c0_21], %22 {strides = array<i32>} : memref<16x128xf32, #tpu.memory_space<vmem>>, vector<16x128xf32>,
    } else {
    }
    return
  }
  func.func @transform_0(%arg0: i32, %arg1: i32) -> (i32, i32) {
    %c0_i32 = arith.constant 0 : i32
    %c0_i32_0 = arith.constant 0 : i32
    return %arg0, %c0_i32 : i32, i32
  }
  func.func @transform_1(%arg0: i32, %arg1: i32) -> (i32, i32) {
    %c0_i32 = arith.constant 0 : i32
    %c0_i32_0 = arith.constant 0 : i32
    return %c0_i32, %arg1 : i32, i32
  }
  func.func @transform_2(%arg0: i32, %arg1: i32) -> (i32, i32) {
    %c0_i32 = arith.constant 0 : i32
    %c0_i32_0 = arith.constant 0 : i32
    return %c0_i32, %arg1 : i32, i32
  }
  func.func @transform_3(%arg0: i32, %arg1: i32) -> (i32, i32) {
    %c0_i32 = arith.constant 0 : i32
    %c0_i32_0 = arith.constant 0 : i32
    return %arg1, %c0_i32 : i32, i32
  }
  func.func @transform_4(%arg0: i32, %arg1: i32) -> (i32, i32) {
    %c0_i32 = arith.constant 0 : i32
    %c0_i32_0 = arith.constant 0 : i32
    %c0_i32_1 = arith.constant 0 : i32
    return %c0_i32, %c0_i32_0 : i32, i32
  }
  func.func @transform_5(%arg0: i32, %arg1: i32) -> (i32, i32) {
    %c0_i32 = arith.constant 0 : i32
    %c0_i32_0 = arith.constant 0 : i32
    return %arg0, %c0_i32 : i32, i32
  }
}

</mosaic_0001>

<llo_original>
// kernel: tpu_custom_call.1
$region0: #{tpu_custom_call.1}
  #allocation0 [shape = 'u32[]', space=smem, size = 0x4, offset = 0x4, fixed_abs, tag = 'smem constant byte address 0x4 - core index']
  #allocation1 [shape = 'u32[72,128]{1,0:T(1,128)}', space=vmem, size = 0x9000, scoped, tag = 'internal scratch']
  #allocation2 [shape = 'f32[16,128]{1,0:T(8,128)}', space=vmem, size = 0x2000, scoped, tag = 'scratch operand']
  %s0 = inlined_call_operand.hbm [shape: f32[16,128], index: 0, kind: input, shape index: {}]
  %s1 = inlined_call_operand.hbm [shape: f32[128,512], index: 1, kind: input, shape index: {}]
  %s2 = inlined_call_operand.hbm [shape: f32[1,512], index: 2, kind: input, shape index: {}]
  %s3 = inlined_call_operand.hbm [shape: f32[512,128], index: 3, kind: input, shape index: {}]
  %s4 = inlined_call_operand.vmem [shape: f32[1,128], index: 4, kind: input, shape index: {}]
  %s5 = inlined_call_operand.hbm [shape: f32[16,128], index: 5, kind: output, shape index: {}]
  %s6 = sld [smem:[#allocation0]]
  $region54: #{tpu_custom_call.1} parent=0
    _
  %s8 = ssub.s32 1, %s6
  %s9 = scalar_select 0, %s8, %s6
  $region1: #{tpu_custom_call.1} parent=0
    #allocation3 [shape = 'u8[8192]{0}', space=vmem, size = 0x2000, scoped, tag = 'input window, operand 0, single buffered']
    #allocation4 [shape = 's32[1]{0}', space=sflag, size = 0x4, scoped, tag = 'scoped memory for tpu_custom_call.1']
    #allocation5 [shape = 's32[1]{0}', space=sflag, size = 0x4, scoped, tag = 'scoped memory for tpu_custom_call.1']
    #allocation6 [shape = 'u8[262144]{0}', space=vmem, size = 0x40000, scoped, tag = 'input window, operand 1, single buffered']
    #allocation7 [shape = 's32[1]{0}', space=sflag, size = 0x4, scoped, tag = 'scoped memory for tpu_custom_call.1']
    #allocation8 [shape = 'u8[2048]{0}', space=vmem, size = 0x800, scoped, tag = 'input window, operand 2, single buffered']
    #allocation9 [shape = 'u8[262144]{0}', space=vmem, size = 0x40000, scoped, tag = 'input window, operand 3, single buffered']
    #allocation10 [shape = 's32[1]{0}', space=sflag, size = 0x4, scoped, tag = 'scoped memory for tpu_custom_call.1']
    #allocation11 [shape = 'u8[8192]{0}', space=vmem, size = 0x2000, scoped, tag = 'output window, operand 0, single buffered']
    %10 = vsyncpa [#allocation4], 0
    %11 = vsyncpa [#allocation7], 0
    %12 = vsyncpa [#allocation10], 0
    %13 = vsyncpa [#allocation5], 0
    // Predicated region
    $region2: #{tpu_custom_call.1} parent=1 // pred_check
      _
    $region3: #{tpu_custom_call.1} parent=1 // pred_check_branch
      %15 = sbr.rel (0) target = $region5
    $region4: #{tpu_custom_call.1} parent=1 // pred_region
      %17 = vsyncadd [#allocation4], 0
      %s18 = sshll.u32 %s0, 4
      %s19 = int_to_ptr.hbm [resolvable:$true] %s18
      %s20 = sshll.u32 [#allocation3], 4
      %s21 = int_to_ptr.vmem [resolvable:$true] %s20
      %26 = dma.hbm_to_vmem [thread:$0]  %s19, 256, %s21, [#allocation4], 128, 128, 8
    $region5: #{tpu_custom_call.1} parent=1 // pred_fallthru
      _
    // Predicated region
    $region6: #{tpu_custom_call.1} parent=1 // pred_check
      _
    $region7: #{tpu_custom_call.1} parent=1 // pred_check_branch
      %28 = sbr.rel (0) target = $region9
    $region8: #{tpu_custom_call.1} parent=1 // pred_region
      %30 = vsyncadd [#allocation7], 0
      %s31 = sshll.u32 %s1, 4
      %s32 = int_to_ptr.hbm [resolvable:$true] %s31
      %s33 = sshll.u32 [#allocation6], 4
      %s34 = int_to_ptr.vmem [resolvable:$true] %s33
      %39 = dma.hbm_to_vmem [thread:$0]  %s32, 8192, %s34, [#allocation7], 512, 512, 32
    $region9: #{tpu_custom_call.1} parent=1 // pred_fallthru
      _
    // Predicated region
    $region10: #{tpu_custom_call.1} parent=1 // pred_check
      _
    $region11: #{tpu_custom_call.1} parent=1 // pred_check_branch
      %41 = sbr.rel (0) target = $region13
    $region12: #{tpu_custom_call.1} parent=1 // pred_region
      %43 = vsyncadd [#allocation7], 0
      %s45 = sshll.u32 %s2, 4
      %s46 = int_to_ptr.hbm [resolvable:$true] %s45
      %s47 = sshll.u32 [#allocation8], 4
      %s48 = int_to_ptr.vmem [resolvable:$true] %s47
      %50 = dma.hbm_to_vmem [thread:$0]  %s46, 64, %s48, [#allocation7]
    $region13: #{tpu_custom_call.1} parent=1 // pred_fallthru
      _
    // Predicated region
    $region14: #{tpu_custom_call.1} parent=1 // pred_check
      _
    $region15: #{tpu_custom_call.1} parent=1 // pred_check_branch
      %52 = sbr.rel (0) target = $region17
    $region16: #{tpu_custom_call.1} parent=1 // pred_region
      %54 = vsyncadd [#allocation10], 0
      %s55 = sshll.u32 %s3, 4
      %s56 = int_to_ptr.hbm [resolvable:$true] %s55
      %s57 = sshll.u32 [#allocation9], 4
      %s58 = int_to_ptr.vmem [resolvable:$true] %s57
      %63 = dma.hbm_to_vmem [thread:$0]  %s56, 8192, %s58, [#allocation10], 128, 128, 8
    $region17: #{tpu_custom_call.1} parent=1 // pred_fallthru
      _
    // Predicated region
    $region18: #{tpu_custom_call.1} parent=1 // pred_check
      _
    $region19: #{tpu_custom_call.1} parent=1 // pred_check_branch
      %65 = sbr.rel (0) target = $region21
    $region20: #{tpu_custom_call.1} parent=1 // pred_region
      _
    $region21: #{tpu_custom_call.1} parent=1 // pred_fallthru
      _
    // Predicated region
    $region22: #{tpu_custom_call.1} parent=1 // pred_check
      _
    $region23: #{tpu_custom_call.1} parent=1 // pred_check_branch
      %67 = sbr.rel (0) target = $region25
    $region24: #{tpu_custom_call.1} parent=1 // pred_region
      %69 = dma.done [#allocation4], 256
    $region25: #{tpu_custom_call.1} parent=1 // pred_fallthru
      _
    // Predicated region
    $region26: #{tpu_custom_call.1} parent=1 // pred_check
      _
    $region27: #{tpu_custom_call.1} parent=1 // pred_check_branch
      %71 = sbr.rel (0) target = $region29
    $region28: #{tpu_custom_call.1} parent=1 // pred_region
      %73 = dma.done [#allocation7], 8192
    $region29: #{tpu_custom_call.1} parent=1 // pred_fallthru
      _
    // Predicated region
    $region30: #{tpu_custom_call.1} parent=1 // pred_check
      _
    $region31: #{tpu_custom_call.1} parent=1 // pred_check_branch
      %75 = sbr.rel (0) target = $region33
    $region32: #{tpu_custom_call.1} parent=1 // pred_region
      %77 = dma.done [#allocation7], 64
    $region33: #{tpu_custom_call.1} parent=1 // pred_fallthru
      _
    // Predicated region
    $region34: #{tpu_custom_call.1} parent=1 // pred_check
      _
    $region35: #{tpu_custom_call.1} parent=1 // pred_check_branch
      %79 = sbr.rel (0) target = $region37
    $region36: #{tpu_custom_call.1} parent=1 // pred_region
      %81 = dma.done [#allocation10], 8192
    $region37: #{tpu_custom_call.1} parent=1 // pred_fallthru
      _
    %p82 = scmp.eq.s32.totalorder 0, 0
    // Predicated region
    $region38: #{tpu_custom_call.1} parent=1 // pred_check
      %p83 = pneg %p82
    $region39: #{tpu_custom_call.1} parent=1 // pred_check_branch
      %85 = sbr.rel (%p83) target = $region41
    $region40: #{tpu_custom_call.1} parent=1 // pred_region
      %86 = vst [vmem:[#allocation2] sm:$0xff] 0.0
      %87 = vst [vmem:[#allocation2 + $0x8] sm:$0xff] 0.0
    $region41: #{tpu_custom_call.1} parent=1 // pred_fallthru
      _
    %v88 = vld [vmem:[#allocation3] sm:$0xff]
    %v89 = vld [vmem:[#allocation3 + $0x8] sm:$0xff]
    %v90 = vld [vmem:[#allocation6] sm:$0xff]
    %v91 = vld [vmem:[#allocation6 + $0x8] sm:$0xff]
    %v92 = vld [vmem:[#allocation6 + $0x10] sm:$0xff]
    %v93 = vld [vmem:[#allocation6 + $0x18] sm:$0xff]
    %v94 = vld [vmem:[#allocation6 + $0x20] sm:$0xff]
    %v95 = vld [vmem:[#allocation6 + $0x28] sm:$0xff]
    %v96 = vld [vmem:[#allocation6 + $0x30] sm:$0xff]
    %v97 = vld [vmem:[#allocation6 + $0x38] sm:$0xff]
    %v98 = vld [vmem:[#allocation6 + $0x40] sm:$0xff]
    %v99 = vld [vmem:[#allocation6 + $0x48] sm:$0xff]
    %v100 = vld [vmem:[#allocation6 + $0x50] sm:$0xff]
    %v101 = vld [vmem:[#allocation6 + $0x58] sm:$0xff]
    %v102 = vld [vmem:[#allocation6 + $0x60] sm:$0xff]
    %v103 = vld [vmem:[#allocation6 + $0x68] sm:$0xff]
    %v104 = vld [vmem:[#allocation6 + $0x70] sm:$0xff]
    %v105 = vld [vmem:[#allocation6 + $0x78] sm:$0xff]
    %v106 = vld [vmem:[#allocation6 + $0x80] sm:$0xff]
    %v107 = vld [vmem:[#allocation6 + $0x88] sm:$0xff]
    %v108 = vld [vmem:[#allocation6 + $0x90] sm:$0xff]
    %v109 = vld [vmem:[#allocation6 + $0x98] sm:$0xff]
    %v110 = vld [vmem:[#allocation6 + $0xa0] sm:$0xff]
    %v111 = vld [vmem:[#allocation6 + $0xa8] sm:$0xff]
    %v112 = vld [vmem:[#allocation6 + $0xb0] sm:$0xff]
    %v113 = vld [vmem:[#allocation6 + $0xb8] sm:$0xff]
    %v114 = vld [vmem:[#allocation6 + $0xc0] sm:$0xff]
    %v115 = vld [vmem:[#allocation6 + $0xc8] sm:$0xff]
    %v116 = vld [vmem:[#allocation6 + $0xd0] sm:$0xff]
    %v117 = vld [vmem:[#allocation6 + $0xd8] sm:$0xff]
    %v118 = vld [vmem:[#allocation6 + $0xe0] sm:$0xff]
    %v119 = vld [vmem:[#allocation6 + $0xe8] sm:$0xff]
    %v120 = vld [vmem:[#allocation6 + $0xf0] sm:$0xff]
    %v121 = vld [vmem:[#allocation6 + $0xf8] sm:$0xff]
    %v122 = vld [vmem:[#allocation6 + $0x100] sm:$0xff]
    %v123 = vld [vmem:[#allocation6 + $0x108] sm:$0xff]
    %v124 = vld [vmem:[#allocation6 + $0x110] sm:$0xff]
    %v125 = vld [vmem:[#allocation6 + $0x118] sm:$0xff]
    %v126 = vld [vmem:[#allocation6 + $0x120] sm:$0xff]
    %v127 = vld [vmem:[#allocation6 + $0x128] sm:$0xff]
    %v128 = vld [vmem:[#allocation6 + $0x130] sm:$0xff]
    %v129 = vld [vmem:[#allocation6 + $0x138] sm:$0xff]
    %v130 = vld [vmem:[#allocation6 + $0x140] sm:$0xff]
    %v131 = vld [vmem:[#allocation6 + $0x148] sm:$0xff]
    %v132 = vld [vmem:[#allocation6 + $0x150] sm:$0xff]
    %v133 = vld [vmem:[#allocation6 + $0x158] sm:$0xff]
    %v134 = vld [vmem:[#allocation6 + $0x160] sm:$0xff]
    %v135 = vld [vmem:[#allocation6 + $0x168] sm:$0xff]
    %v136 = vld [vmem:[#allocation6 + $0x170] sm:$0xff]
    %v137 = vld [vmem:[#allocation6 + $0x178] sm:$0xff]
    %v138 = vld [vmem:[#allocation6 + $0x180] sm:$0xff]
    %v139 = vld [vmem:[#allocation6 + $0x188] sm:$0xff]
    %v140 = vld [vmem:[#allocation6 + $0x190] sm:$0xff]
    %v141 = vld [vmem:[#allocation6 + $0x198] sm:$0xff]
    %v142 = vld [vmem:[#allocation6 + $0x1a0] sm:$0xff]
    %v143 = vld [vmem:[#allocation6 + $0x1a8] sm:$0xff]
    %v144 = vld [vmem:[#allocation6 + $0x1b0] sm:$0xff]
    %v145 = vld [vmem:[#allocation6 + $0x1b8] sm:$0xff]
    %v146 = vld [vmem:[#allocation6 + $0x1c0] sm:$0xff]
    %v147 = vld [vmem:[#allocation6 + $0x1c8] sm:$0xff]
    %v148 = vld [vmem:[#allocation6 + $0x1d0] sm:$0xff]
    %v149 = vld [vmem:[#allocation6 + $0x1d8] sm:$0xff]
    %v150 = vld [vmem:[#allocation6 + $0x1e0] sm:$0xff]
    %v151 = vld [vmem:[#allocation6 + $0x1e8] sm:$0xff]
    %v152 = vld [vmem:[#allocation6 + $0x1f0] sm:$0xff]
    %v153 = vld [vmem:[#allocation6 + $0x1f8] sm:$0xff]
    %v154 = vld [vmem:[#allocation8] sm:$0xf]
    %v156 = vperm.slane %v154, 0
    %v157 = vperm.slane %v154, 1
    %v158 = vperm.slane %v154, 2
    %v159 = vperm.slane %v154, 3
    %164 = vmatpush.msra.mxu0 %v150
    %165 = vmatpush.msra.mxu0 %v146
    %166 = vmatpush.msra.mxu0 %v142
    %167 = vmatpush.msra.mxu0 %v138
    %168 = vmatpush.msra.mxu0 %v134
    %169 = vmatpush.msra.mxu0 %v130
    %170 = vmatpush.msra.mxu0 %v126
    %171 = vmatpush.msra.mxu0 %v122
    %172 = vmatpush.msra.mxu0 %v118
    %173 = vmatpush.msra.mxu0 %v114
    %174 = vmatpush.msra.mxu0 %v110
    %175 = vmatpush.msra.mxu0 %v106
    %176 = vmatpush.msra.mxu0 %v102
    %177 = vmatpush.msra.mxu0 %v98
    %178 = vmatpush.msra.mxu0 %v94
    %179 = vmatpush.msra.mxu0 %v90
    %180 = vmatmul.f32.gmra.mxu0 %v88
    %v181 = vpop.f32.mrf.mxu0
    %v182 = vadd.f32 %v156, %v181
    %183 = vmatmul.f32.gmra.mxu0 %v89
    %v184 = vpop.f32.mrf.mxu0
    %v185 = vadd.f32 %v156, %v184
    %186 = vdwg.mxu0
    %187 = vmatpush.msra.mxu0 %v151
    %188 = vmatpush.msra.mxu0 %v147
    %189 = vmatpush.msra.mxu0 %v143
    %190 = vmatpush.msra.mxu0 %v139
    %191 = vmatpush.msra.mxu0 %v135
    %192 = vmatpush.msra.mxu0 %v131
    %193 = vmatpush.msra.mxu0 %v127
    %194 = vmatpush.msra.mxu0 %v123
    %195 = vmatpush.msra.mxu0 %v119
    %196 = vmatpush.msra.mxu0 %v115
    %197 = vmatpush.msra.mxu0 %v111
    %198 = vmatpush.msra.mxu0 %v107
    %199 = vmatpush.msra.mxu0 %v103
    %200 = vmatpush.msra.mxu0 %v99
    %201 = vmatpush.msra.mxu0 %v95
    %202 = vmatpush.msra.mxu0 %v91
    %203 = vmatmul.f32.gmra.mxu0 %v88
    %v204 = vpop.f32.mrf.mxu0
    %v205 = vadd.f32 %v157, %v204
    %206 = vmatmul.f32.gmra.mxu0 %v89
    %v207 = vpop.f32.mrf.mxu0
    %v208 = vadd.f32 %v157, %v207
    %209 = vdwg.mxu0
    %210 = vmatpush.msra.mxu0 %v152
    %211 = vmatpush.msra.mxu0 %v148
    %212 = vmatpush.msra.mxu0 %v144
    %213 = vmatpush.msra.mxu0 %v140
    %214 = vmatpush.msra.mxu0 %v136
    %215 = vmatpush.msra.mxu0 %v132
    %216 = vmatpush.msra.mxu0 %v128
    %217 = vmatpush.msra.mxu0 %v124
    %218 = vmatpush.msra.mxu0 %v120
    %219 = vmatpush.msra.mxu0 %v116
    %220 = vmatpush.msra.mxu0 %v112
    %221 = vmatpush.msra.mxu0 %v108
    %222 = vmatpush.msra.mxu0 %v104
    %223 = vmatpush.msra.mxu0 %v100
    %224 = vmatpush.msra.mxu0 %v96
    %225 = vmatpush.msra.mxu0 %v92
    %226 = vmatmul.f32.gmra.mxu0 %v88
    %v227 = vpop.f32.mrf.mxu0
    %v228 = vadd.f32 %v158, %v227
    %229 = vmatmul.f32.gmra.mxu0 %v89
    %v230 = vpop.f32.mrf.mxu0
    %v231 = vadd.f32 %v158, %v230
    %232 = vdwg.mxu0
    %233 = vmatpush.msra.mxu0 %v153
    %234 = vmatpush.msra.mxu0 %v149
    %235 = vmatpush.msra.mxu0 %v145
    %236 = vmatpush.msra.mxu0 %v141
    %237 = vmatpush.msra.mxu0 %v137
    %238 = vmatpush.msra.mxu0 %v133
    %239 = vmatpush.msra.mxu0 %v129
    %240 = vmatpush.msra.mxu0 %v125
    %241 = vmatpush.msra.mxu0 %v121
    %242 = vmatpush.msra.mxu0 %v117
    %243 = vmatpush.msra.mxu0 %v113
    %244 = vmatpush.msra.mxu0 %v109
    %245 = vmatpush.msra.mxu0 %v105
    %246 = vmatpush.msra.mxu0 %v101
    %247 = vmatpush.msra.mxu0 %v97
    %248 = vmatpush.msra.mxu0 %v93
    %249 = vmatmul.f32.gmra.mxu0 %v88
    %v250 = vpop.f32.mrf.mxu0
    %v251 = vadd.f32 %v159, %v250
    %252 = vmatmul.f32.gmra.mxu0 %v89
    %v253 = vpop.f32.mrf.mxu0
    %v254 = vadd.f32 %v159, %v253
    %255 = vdwg.mxu0
    %v256 = vmax.f32 %v182, 0.0
    %v257 = vmax.f32 %v205, 0.0
    %v258 = vmax.f32 %v228, 0.0
    %v259 = vmax.f32 %v251, 0.0
    %v260 = vmax.f32 %v185, 0.0
    %v261 = vmax.f32 %v208, 0.0
    %v262 = vmax.f32 %v231, 0.0
    %v263 = vmax.f32 %v254, 0.0
    %v264 = vld [vmem:[#allocation2] sm:$0xff]
    %v265 = vld [vmem:[#allocation2 + $0x8] sm:$0xff]
    %v266 = vld [vmem:[#allocation9] sm:$0xff]
    %v267 = vld [vmem:[#allocation9 + $0x8] sm:$0xff]
    %v268 = vld [vmem:[#allocation9 + $0x10] sm:$0xff]
    %v269 = vld [vmem:[#allocation9 + $0x18] sm:$0xff]
    %v270 = vld [vmem:[#allocation9 + $0x20] sm:$0xff]
    %v271 = vld [vmem:[#allocation9 + $0x28] sm:$0xff]
    %v272 = vld [vmem:[#allocation9 + $0x30] sm:$0xff]
    %v273 = vld [vmem:[#allocation9 + $0x38] sm:$0xff]
    %v274 = vld [vmem:[#allocation9 + $0x40] sm:$0xff]
    %v275 = vld [vmem:[#allocation9 + $0x48] sm:$0xff]
    %v276 = vld [vmem:[#allocation9 + $0x50] sm:$0xff]
    %v277 = vld [vmem:[#allocation9 + $0x58] sm:$0xff]
    %v278 = vld [vmem:[#allocation9 + $0x60] sm:$0xff]
    %v279 = vld [vmem:[#allocation9 + $0x68] sm:$0xff]
    %v280 = vld [vmem:[#allocation9 + $0x70] sm:$0xff]
    %v281 = vld [vmem:[#allocation9 + $0x78] sm:$0xff]
    %v282 = vld [vmem:[#allocation9 + $0x80] sm:$0xff]
    %v283 = vld [vmem:[#allocation9 + $0x88] sm:$0xff]
    %v284 = vld [vmem:[#allocation9 + $0x90] sm:$0xff]
    %v285 = vld [vmem:[#allocation9 + $0x98] sm:$0xff]
    %v286 = vld [vmem:[#allocation9 + $0xa0] sm:$0xff]
    %v287 = vld [vmem:[#allocation9 + $0xa8] sm:$0xff]
    %v288 = vld [vmem:[#allocation9 + $0xb0] sm:$0xff]
    %v289 = vld [vmem:[#allocation9 + $0xb8] sm:$0xff]
    %v290 = vld [vmem:[#allocation9 + $0xc0] sm:$0xff]
    %v291 = vld [vmem:[#allocation9 + $0xc8] sm:$0xff]
    %v292 = vld [vmem:[#allocation9 + $0xd0] sm:$0xff]
    %v293 = vld [vmem:[#allocation9 + $0xd8] sm:$0xff]
    %v294 = vld [vmem:[#allocation9 + $0xe0] sm:$0xff]
    %v295 = vld [vmem:[#allocation9 + $0xe8] sm:$0xff]
    %v296 = vld [vmem:[#allocation9 + $0xf0] sm:$0xff]
    %v297 = vld [vmem:[#allocation9 + $0xf8] sm:$0xff]
    %v298 = vld [vmem:[#allocation9 + $0x100] sm:$0xff]
    %v299 = vld [vmem:[#allocation9 + $0x108] sm:$0xff]
    %v300 = vld [vmem:[#allocation9 + $0x110] sm:$0xff]
    %v301 = vld [vmem:[#allocation9 + $0x118] sm:$0xff]
    %v302 = vld [vmem:[#allocation9 + $0x120] sm:$0xff]
    %v303 = vld [vmem:[#allocation9 + $0x128] sm:$0xff]
    %v304 = vld [vmem:[#allocation9 + $0x130] sm:$0xff]
    %v305 = vld [vmem:[#allocation9 + $0x138] sm:$0xff]
    %v306 = vld [vmem:[#allocation9 + $0x140] sm:$0xff]
    %v307 = vld [vmem:[#allocation9 + $0x148] sm:$0xff]
    %v308 = vld [vmem:[#allocation9 + $0x150] sm:$0xff]
    %v309 = vld [vmem:[#allocation9 + $0x158] sm:$0xff]
    %v310 = vld [vmem:[#allocation9 + $0x160] sm:$0xff]
    %v311 = vld [vmem:[#allocation9 + $0x168] sm:$0xff]
    %v312 = vld [vmem:[#allocation9 + $0x170] sm:$0xff]
    %v313 = vld [vmem:[#allocation9 + $0x178] sm:$0xff]
    %v314 = vld [vmem:[#allocation9 + $0x180] sm:$0xff]
    %v315 = vld [vmem:[#allocation9 + $0x188] sm:$0xff]
    %v316 = vld [vmem:[#allocation9 + $0x190] sm:$0xff]
    %v317 = vld [vmem:[#allocation9 + $0x198] sm:$0xff]
    %v318 = vld [vmem:[#allocation9 + $0x1a0] sm:$0xff]
    %v319 = vld [vmem:[#allocation9 + $0x1a8] sm:$0xff]
    %v320 = vld [vmem:[#allocation9 + $0x1b0] sm:$0xff]
    %v321 = vld [vmem:[#allocation9 + $0x1b8] sm:$0xff]
    %v322 = vld [vmem:[#allocation9 + $0x1c0] sm:$0xff]
    %v323 = vld [vmem:[#allocation9 + $0x1c8] sm:$0xff]
    %v324 = vld [vmem:[#allocation9 + $0x1d0] sm:$0xff]
    %v325 = vld [vmem:[#allocation9 + $0x1d8] sm:$0xff]
    %v326 = vld [vmem:[#allocation9 + $0x1e0] sm:$0xff]
    %v327 = vld [vmem:[#allocation9 + $0x1e8] sm:$0xff]
    %v328 = vld [vmem:[#allocation9 + $0x1f0] sm:$0xff]
    %v329 = vld [vmem:[#allocation9 + $0x1f8] sm:$0xff]
    %330 = vmatpush.msra.mxu0 %v281
    %331 = vmatpush.msra.mxu0 %v280
    %332 = vmatpush.msra.mxu0 %v279
    %333 = vmatpush.msra.mxu0 %v278
    %334 = vmatpush.msra.mxu0 %v277
    %335 = vmatpush.msra.mxu0 %v276
    %336 = vmatpush.msra.mxu0 %v275
    %337 = vmatpush.msra.mxu0 %v274
    %338 = vmatpush.msra.mxu0 %v273
    %339 = vmatpush.msra.mxu0 %v272
    %340 = vmatpush.msra.mxu0 %v271
    %341 = vmatpush.msra.mxu0 %v270
    %342 = vmatpush.msra.mxu0 %v269
    %343 = vmatpush.msra.mxu0 %v268
    %344 = vmatpush.msra.mxu0 %v267
    %345 = vmatpush.msra.mxu0 %v266
    %346 = vmatmul.f32.gmra.mxu0 %v256
    %v347 = vpop.f32.mrf.mxu0
    %v348 = vadd.f32 0.0, %v347
    %349 = vmatmul.f32.gmra.mxu0 %v260
    %v350 = vpop.f32.mrf.mxu0
    %v351 = vadd.f32 0.0, %v350
    %352 = vdwg.mxu0
    %353 = vmatpush.msra.mxu0 %v297
    %354 = vmatpush.msra.mxu0 %v296
    %355 = vmatpush.msra.mxu0 %v295
    %356 = vmatpush.msra.mxu0 %v294
    %357 = vmatpush.msra.mxu0 %v293
    %358 = vmatpush.msra.mxu0 %v292
    %359 = vmatpush.msra.mxu0 %v291
    %360 = vmatpush.msra.mxu0 %v290
    %361 = vmatpush.msra.mxu0 %v289
    %362 = vmatpush.msra.mxu0 %v288
    %363 = vmatpush.msra.mxu0 %v287
    %364 = vmatpush.msra.mxu0 %v286
    %365 = vmatpush.msra.mxu0 %v285
    %366 = vmatpush.msra.mxu0 %v284
    %367 = vmatpush.msra.mxu0 %v283
    %368 = vmatpush.msra.mxu0 %v282
    %369 = vmatmul.f32.gmra.mxu0 %v257
    %v370 = vpop.f32.mrf.mxu0
    %v371 = vadd.f32 %v348, %v370
    %372 = vmatmul.f32.gmra.mxu0 %v261
    %v373 = vpop.f32.mrf.mxu0
    %v374 = vadd.f32 %v351, %v373
    %375 = vdwg.mxu0
    %376 = vmatpush.msra.mxu0 %v313
    %377 = vmatpush.msra.mxu0 %v312
    %378 = vmatpush.msra.mxu0 %v311
    %379 = vmatpush.msra.mxu0 %v310
    %380 = vmatpush.msra.mxu0 %v309
    %381 = vmatpush.msra.mxu0 %v308
    %382 = vmatpush.msra.mxu0 %v307
    %383 = vmatpush.msra.mxu0 %v306
    %384 = vmatpush.msra.mxu0 %v305
    %385 = vmatpush.msra.mxu0 %v304
    %386 = vmatpush.msra.mxu0 %v303
    %387 = vmatpush.msra.mxu0 %v302
    %388 = vmatpush.msra.mxu0 %v301
    %389 = vmatpush.msra.mxu0 %v300
    %390 = vmatpush.msra.mxu0 %v299
    %391 = vmatpush.msra.mxu0 %v298
    %392 = vmatmul.f32.gmra.mxu0 %v258
    %v393 = vpop.f32.mrf.mxu0
    %v394 = vadd.f32 %v371, %v393
    %395 = vmatmul.f32.gmra.mxu0 %v262
    %v396 = vpop.f32.mrf.mxu0
    %v397 = vadd.f32 %v374, %v396
    %398 = vdwg.mxu0
    %399 = vmatpush.msra.mxu0 %v329
    %400 = vmatpush.msra.mxu0 %v328
    %401 = vmatpush.msra.mxu0 %v327
    %402 = vmatpush.msra.mxu0 %v326
    %403 = vmatpush.msra.mxu0 %v325
    %404 = vmatpush.msra.mxu0 %v324
    %405 = vmatpush.msra.mxu0 %v323
    %406 = vmatpush.msra.mxu0 %v322
    %407 = vmatpush.msra.mxu0 %v321
    %408 = vmatpush.msra.mxu0 %v320
    %409 = vmatpush.msra.mxu0 %v319
    %410 = vmatpush.msra.mxu0 %v318
    %411 = vmatpush.msra.mxu0 %v317
    %412 = vmatpush.msra.mxu0 %v316
    %413 = vmatpush.msra.mxu0 %v315
    %414 = vmatpush.msra.mxu0 %v314
    %415 = vmatmul.f32.gmra.mxu0 %v259
    %v416 = vpop.f32.mrf.mxu0
    %v417 = vadd.f32 %v394, %v416
    %418 = vmatmul.f32.gmra.mxu0 %v263
    %v419 = vpop.f32.mrf.mxu0
    %v420 = vadd.f32 %v397, %v419
    %421 = vdwg.mxu0
    %v422 = vadd.f32 %v264, %v417
    %v423 = vadd.f32 %v265, %v420
    %424 = vst [vmem:[#allocation2] sm:$0xff] %v422
    %425 = vst [vmem:[#allocation2 + $0x8] sm:$0xff] %v423
    // Predicated region
    $region42: #{tpu_custom_call.1} parent=1 // pred_check
      %p426 = pneg %p82
    $region43: #{tpu_custom_call.1} parent=1 // pred_check_branch
      %428 = sbr.rel (%p426) target = $region45
    $region44: #{tpu_custom_call.1} parent=1 // pred_region
      %v429 = vld [vmem:[#allocation2] sm:$0xff]
      %v430 = vld [vmem:[#allocation2 + $0x8] sm:$0xff]
      %v431 = vld [vmem:[%s4] sm:$0x1]
      %v433 = vperm.slane %v431, 0
      %v435 = vadd.f32 %v429, %v433
      %v436 = vadd.f32 %v430, %v433
      %437 = vst [vmem:[#allocation11] sm:$0xff] %v435
      %438 = vst [vmem:[#allocation11 + $0x8] sm:$0xff] %v436
    $region45: #{tpu_custom_call.1} parent=1 // pred_fallthru
      _
    // Predicated region
    $region46: #{tpu_custom_call.1} parent=1 // pred_check
      _
    $region47: #{tpu_custom_call.1} parent=1 // pred_check_branch
      %440 = sbr.rel (0) target = $region49
    $region48: #{tpu_custom_call.1} parent=1 // pred_region
      %442 = vsyncadd [#allocation5], 0
      %s443 = sshll.u32 [#allocation11], 4
      %s444 = int_to_ptr.vmem [resolvable:$true] %s443
      %s445 = sshll.u32 %s5, 4
      %s446 = int_to_ptr.hbm [resolvable:$true] %s445
      %451 = dma.vmem_to_hbm [thread:$0]  %s444, 256, %s446, [#allocation5], 128, 128, 8
    $region49: #{tpu_custom_call.1} parent=1 // pred_fallthru
      _
    // Predicated region
    $region50: #{tpu_custom_call.1} parent=1 // pred_check
      _
    $region51: #{tpu_custom_call.1} parent=1 // pred_check_branch
      %453 = sbr.rel (0) target = $region53
    $region52: #{tpu_custom_call.1} parent=1 // pred_region
      %455 = dma.done [#allocation5], 256
    $region53: #{tpu_custom_call.1} parent=1 // pred_fallthru
      _
    %456 = vsyncpa [#allocation4], 1
    %457 = vsyncpa [#allocation7], 1
    %458 = vsyncpa [#allocation10], 1
    %459 = vsyncpa [#allocation5], 1

</llo_original>
